<compile_context>
chip_gen: v5e
topology: v5e:2x2
jax: 0.10.0
libtpu: 0.0.40
codegen_flags: <defaults>
</compile_context>

<pallas_src>
import functools

import jax
import jax.numpy as jnp
from jax import lax
from jax.experimental import pallas as pl
from jax.experimental.pallas import tpu as pltpu

EPS = 1e-12


def _round_up(x: int, m: int) -> int:
    return -(-x // m) * m


def _l2norm_kernel(x_ref, o_ref, *, eps_sq: float):
    # x_ref block: (tile_rows, Dp); Dp maps to lanes (multiple of 128).
    x = x_ref[...]
    xf = x.astype(jnp.float32)
    sq_sum = jnp.sum(xf * xf, axis=-1, keepdims=True)            # (tile_rows, 1) f32
    # clamp_min(norm, eps) == rsqrt(clamp_min(norm^2, eps^2)); eps^2 = 1e-24 is
    # still a normal f32. rsqrt runs on the EUP (its own VLIW slot) and the
    # per-element divide becomes a VPU multiply. Keep the multiply in f32 (VPU
    # slack is huge in this memory-bound kernel), cast once at the store.
    inv = lax.rsqrt(jnp.maximum(sq_sum, jnp.float32(eps_sq)))    # (tile_rows, 1) f32
    o_ref[...] = (xf * inv).astype(o_ref.dtype)


def _vmem_budgets():
    """(max_block_bytes, vmem_limit_bytes), gated on the chip's VMEM size."""
    try:
        cap = pltpu.get_tpu_info().vmem_capacity_bytes
    except Exception:
        cap = 64 * 1024 * 1024            # assume the tightest budget (v7x per-TC)
    if cap >= 100 * 1024 * 1024:          # v5e / v6e: 128 MiB physical VMEM
        return 4 * 1024 * 1024, 64 * 1024 * 1024
    # v7x: 64 MiB per TC -> smaller blocks, leave headroom for Mosaic scratch
    # and the f32 upcast/square intermediates.
    return 2 * 1024 * 1024, 48 * 1024 * 1024


def _choose_tile_rows(B: int, row_bytes: int, max_block_bytes: int) -> int:
    """Fixed-target row tile (multiple of 8) used with a cdiv grid.

    Measured tiled-elementwise data: 1-4 MiB (~512-row) blocks reach ~85% of
    HBM roofline while 8-row blocks are pipeline-overhead bound (~29%). Also
    keeps the grid >= 2 steps whenever B > 8 so both v7x TensorCores get work.
    """
    if B <= 8:
        return B                          # full-extent row block (always legal)
    cap = max(8, (max_block_bytes // max(row_bytes, 1)) // 8 * 8)
    # TODO(synk): if even an 8-row block exceeds the budget (huge D), split D
    # across a second "arbitrary" grid axis with a per-row partial-sum scratch
    # instead of relying on the capped 8-row block.
    tile = min(512, cap)
    if tile >= B:
        # Shrink so the grid has >= 2 steps (balances the two v7x cores).
        tile = min(tile, max(8, _round_up(pl.cdiv(B, 2), 8)))
    return tile


def l2_normalize(x: jax.Array, *, dim: int = 1, eps: float = EPS) -> jax.Array:
    """L2-normalize `x` along `dim`, matching F.normalize(x, p=2, dim=dim, eps=eps)."""
    ndim = x.ndim
    dim = dim % ndim
    # Present the normalization axis as the last (lane) axis; for the canonical
    # (batch, features) input with dim=1 this is a no-op (pure layout plumbing).
    x_moved = jnp.moveaxis(x, dim, -1) if dim != ndim - 1 else x
    lead_shape = x_moved.shape[:-1]
    D = x_moved.shape[-1]
    B = 1
    for s in lead_shape:
        B *= s
    x2 = x_moved.reshape(B, D)

    # Lane-dense layout: pad the feature axis to a multiple of 128 (zero pad
    # does not change the sum of squares); slice back after the kernel.
    Dp = _round_up(D, 128)
    if Dp != D:
        x2 = jnp.pad(x2, ((0, 0), (0, Dp - D)))

    max_block_bytes, vmem_limit_bytes = _vmem_budgets()
    row_bytes = Dp * x2.dtype.itemsize
    tile_rows = _choose_tile_rows(B, row_bytes, max_block_bytes)
    # Ragged last block is fine: rows are independent, and out-of-bounds rows
    # of the output block are never written back.
    grid = (pl.cdiv(B, tile_rows),)

    kernel = functools.partial(_l2norm_kernel, eps_sq=float(eps) * float(eps))

    y2 = pl.pallas_call(
        kernel,
        out_shape=jax.ShapeDtypeStruct((B, Dp), x2.dtype),
        grid_spec=pltpu.PrefetchScalarGridSpec(
            num_scalar_prefetch=0,
            grid=grid,
            in_specs=[pl.BlockSpec((tile_rows, Dp), lambda i: (i, 0))],
            out_specs=pl.BlockSpec((tile_rows, Dp), lambda i: (i, 0)),
        ),
        compiler_params=pltpu.CompilerParams(
            dimension_semantics=("parallel",),
            vmem_limit_bytes=vmem_limit_bytes,
        ),
    )(x2)

    if Dp != D:
        y2 = y2[:, :D]
    y = y2.reshape(x_moved.shape)
    if dim != ndim - 1:
        y = jnp.moveaxis(y, -1, dim)
    return y


if __name__ == "__main__":
    key = jax.random.PRNGKey(0)
    # (batch, features); the module normalizes along dim=1.
    x = jax.random.normal(key, (16, 256), dtype=jnp.float32)

    y = jax.block_until_ready(l2_normalize(x))

    # Reference (same semantics as F.normalize(p=2, dim=1, eps=1e-12)).
    norm = jnp.sqrt(jnp.sum(x.astype(jnp.float32) ** 2, axis=1, keepdims=True))
    y_ref = x / jnp.maximum(norm, EPS)

    assert y.shape == x.shape and y.dtype == x.dtype
    assert jnp.allclose(y, y_ref, atol=1e-6, rtol=1e-5), "mismatch vs reference"

    print("KERNEL_OK")
</pallas_src>

<mosaic_0001>
module attributes {stable_mosaic.version = 11 : i64} {
  func.func @_l2norm_kernel(%arg0: i32, %arg1: memref<8x256xf32, #tpu.memory_space<vmem>>, %arg2: memref<8x256xf32, #tpu.memory_space<vmem>>) attributes {dimension_semantics = [#tpu.dimension_semantics<parallel>], iteration_bounds = array<i64: 2>, scalar_prefetch = 0 : i64, scratch_operands = 0 : i64, tpu.core_type = #tpu.core_type<tc>, window_params = [{transform_indices = @transform_0, window_bounds = array<i64: 8, 256>}, {transform_indices = @transform_1, window_bounds = array<i64: 8, 256>}]} {
    %c0 = arith.constant 0 : index
    %c0_0 = arith.constant 0 : index
    %0 = vector.load %arg1[%c0, %c0_0] : memref<8x256xf32, #tpu.memory_space<vmem>>, vector<8x256xf32>
    %1 = arith.mulf %0, %0 : vector<8x256xf32>
    %cst = arith.constant dense<0.000000e+00> : vector<8xf32>
    %2 = vector.multi_reduction <add>, %1, %cst [1] : vector<8x256xf32> to vector<8xf32>
    %3 = vector.shape_cast %2 : vector<8xf32> to vector<8x1xf32>
    %cst_1 = arith.constant 1.000000e-24 : f32
    %4 = vector.broadcast %cst_1 : f32 to vector<8x1xf32>
    %5 = arith.maximumf %3, %4 : vector<8x1xf32>
    %6 = math.rsqrt %5 : vector<8x1xf32>
    %7 = vector.broadcast %6 : vector<8x1xf32> to vector<8x256xf32>
    %8 = arith.mulf %0, %7 : vector<8x256xf32>
    %c0_2 = arith.constant 0 : index
    %c0_3 = arith.constant 0 : index
    %9 = vector.load %arg2[%c0_2, %c0_3] : memref<8x256xf32, #tpu.memory_space<vmem>>, vector<8x256xf32>
    tpu.vector_store %arg2[%c0_2, %c0_3], %8 {strides = array<i32>} : memref<8x256xf32, #tpu.memory_space<vmem>>, vector<8x256xf32>,
    return
  }
  func.func @transform_0(%arg0: i32) -> (i32, i32) {
    %c0_i32 = arith.constant 0 : i32
    %c0_i32_0 = arith.constant 0 : i32
    return %arg0, %c0_i32 : i32, i32
  }
  func.func @transform_1(%arg0: i32) -> (i32, i32) {
    %c0_i32 = arith.constant 0 : i32
    %c0_i32_0 = arith.constant 0 : i32
    return %arg0, %c0_i32 : i32, i32
  }
}

</mosaic_0001>

<llo_original>
// kernel: tpu_custom_call.1
$region0: #{tpu_custom_call.1}
  #allocation0 [shape = 'u32[]', space=smem, size = 0x4, offset = 0x4, fixed_abs, tag = 'smem constant byte address 0x4 - core index']
  #allocation1 [shape = 'u32[72,128]{1,0:T(1,128)}', space=vmem, size = 0x9000, scoped, tag = 'internal scratch']
  %s0 = inlined_call_operand.hbm [shape: f32[16,256], index: 0, kind: input, shape index: {}]
  %s1 = inlined_call_operand.hbm [shape: f32[16,256], index: 1, kind: output, shape index: {}]
  %s2 = sld [smem:[#allocation0]]
  $region41: #{tpu_custom_call.1} parent=0
    _
  %s4 = ssub.s32 1, %s2
  %s5 = scalar_select 0, %s4, %s2
  $region1: #{tpu_custom_call.1} parent=0
    #allocation2 [shape = 'u8[16384]{0}', space=vmem, size = 0x4000, scoped, tag = 'input window, operand 0']
    #allocation3 [shape = 's32[2]{0}', space=sflag, size = 0x8, scoped, tag = 'scoped memory for tpu_custom_call.1']
    #allocation4 [shape = 's32[2]{0}', space=sflag, size = 0x8, scoped, tag = 'scoped memory for tpu_custom_call.1']
    #allocation5 [shape = 'u8[16384]{0}', space=vmem, size = 0x4000, scoped, tag = 'output window, operand 0']
    %6 = vsyncpa [#allocation3], 0
    %s7 = scalar_lea.sflag [#allocation3], 1
    %8 = vsyncpa %s7, 0
    %9 = vsyncpa [#allocation4], 0
    %s10 = scalar_lea.sflag [#allocation4], 1
    %11 = vsyncpa %s10, 0
    loop: start=0, step=1, limit=4
    $region2: #{tpu_custom_call.1} parent=1 // loop_pre_header
      _
    $region3: #{tpu_custom_call.1} parent=1 // loop_header
      %s13 = sphi 0, %s17
      %p14 = scmp.ge.s32.totalorder %s13, 4
      %s23 = sphi 0, %s25
      %s26 = sphi 0, %s23
      %s27 = sphi 0, %s26
      %s43 = sphi 0, %s27
      %s49 = sphi 0, %s51
      %s52 = sphi 0, %s49
      %s53 = sphi 0, %s52
      %s69 = sphi 0, %s53
    $region4: #{tpu_custom_call.1} parent=1 // loop_header_branch
      %16 = sbr.rel (%p14) target = $region8
    $region5: #{tpu_custom_call.1} parent=1 // loop_body
      %s18 = ssub.s32 %s13, 1
      %s19 = ssub.s32 %s13, 2
      %s20 = sadd.s32 %s13, 1
      %s21 = ssub.s32 %s13, %s20
      %p22 = scmp.eq.s32.totalorder %s21, 0
      %s24 = sadd.s32 %s23, 1
      %s25 = scalar_select %p22, %s23, %s24
      %p28 = pneg %p22
      %p29 = scmp.eq.s32.totalorder %s13, 1
      %p30 = por %p28, %p29
      %p31 = scmp.ne.s32.totalorder %s23, %s26
      %p32 = scmp.eq.s32.totalorder %s13, 0
      %p33 = por %p31, %p32
      %p34 = scmp.ne.s32.totalorder %s23, %s26
      %p35 = scmp.eq.s32.totalorder %s18, 1
      %p36 = por %p34, %p35
      %p37 = scmp.ne.s32.totalorder %s26, %s27
      %p38 = scmp.eq.s32.totalorder %s18, 0
      %p39 = por %p37, %p38
      %p40 = scmp.ne.s32.totalorder %s26, %s27
      %p41 = scmp.eq.s32.totalorder %s19, 1
      %p42 = por %p40, %p41
      %p44 = scmp.ne.s32.totalorder %s27, %s43
      %p45 = scmp.eq.s32.totalorder %s19, 0
      %p46 = por %p44, %p45
      %s47 = ssub.s32 %s13, %s20
      %p48 = scmp.eq.s32.totalorder %s47, 0
      %s50 = sadd.s32 %s49, 1
      %s51 = scalar_select %p48, %s49, %s50
      %p54 = pneg %p48
      %p55 = scmp.eq.s32.totalorder %s13, 1
      %p56 = por %p54, %p55
      %p57 = scmp.ne.s32.totalorder %s49, %s52
      %p58 = scmp.eq.s32.totalorder %s13, 0
      %p59 = por %p57, %p58
      %p60 = scmp.ne.s32.totalorder %s49, %s52
      %p61 = scmp.eq.s32.totalorder %s18, 1
      %p62 = por %p60, %p61
      %p63 = scmp.ne.s32.totalorder %s52, %s53
      %p64 = scmp.eq.s32.totalorder %s18, 0
      %p65 = por %p63, %p64
      %p66 = scmp.ne.s32.totalorder %s52, %s53
      %p67 = scmp.eq.s32.totalorder %s19, 1
      %p68 = por %p66, %p67
      %p70 = scmp.ne.s32.totalorder %s53, %s69
      %p71 = scmp.eq.s32.totalorder %s19, 0
      %p72 = por %p70, %p71
      %p73 = scmp.le.s32.totalorder 1, %s13
      %p74 = scmp.lt.s32.totalorder %s13, 3
      %p75 = pnand %p73, %p74
      %p76 = pneg %p75
      // Predicated region
      $region9: #{tpu_custom_call.1} parent=5 // pred_check
        _
      $region10: #{tpu_custom_call.1} parent=5 // pred_check_branch
        %78 = sbr.rel (%p75) target = $region12
      $region11: #{tpu_custom_call.1} parent=5 // pred_region
        %s79 = ssub.s32 %s13, 1
      $region12: #{tpu_custom_call.1} parent=5 // pred_fallthru
        _
      %p80 = scmp.lt.s32.totalorder %s13, 2
      // Predicated region
      $region13: #{tpu_custom_call.1} parent=5 // pred_check
        %p81 = pneg %p80
      $region14: #{tpu_custom_call.1} parent=5 // pred_check_branch
        %83 = sbr.rel (%p81) target = $region16
      $region15: #{tpu_custom_call.1} parent=5 // pred_region
        // Predicated region
        $region17: #{tpu_custom_call.1} parent=15 // pred_check
          %p84 = pneg %p33
        $region18: #{tpu_custom_call.1} parent=15 // pred_check_branch
          %86 = sbr.rel (%p84) target = $region20
        $region19: #{tpu_custom_call.1} parent=15 // pred_region
          %s87 = sand.u32 %s23, 1
          %s88 = scalar_lea.sflag [#allocation3], %s87
          %s89 = sand.u32 %s23, 1
          %s90 = smul.addr %s89, 16
          %s91 = scalar_lea.vmem [#allocation2], %s90
          %93 = vsyncadd %s88, 0
          %s94 = smul.addr %s13, 2
          %s95 = smul.addr %s94, 8
          %s96 = scalar_lea.hbm %s0, %s95
          %s98 = sshll.u32 %s96, 4
          %s99 = int_to_ptr.hbm [resolvable:$true] %s98
          %s100 = sshll.u32 %s91, 4
          %s101 = int_to_ptr.vmem [resolvable:$true] %s100
          %103 = dma.hbm_to_vmem [thread:$0]  %s99, 256, %s101, %s88
        $region20: #{tpu_custom_call.1} parent=15 // pred_fallthru
          _
      $region16: #{tpu_custom_call.1} parent=5 // pred_fallthru
        _
      %p104 = scmp.le.s32.totalorder 1, %s13
      %p105 = scmp.lt.s32.totalorder %s13, 3
      %p106 = pnand %p104, %p105
      %p107 = pneg %p106
      // Predicated region
      $region21: #{tpu_custom_call.1} parent=5 // pred_check
        _
      $region22: #{tpu_custom_call.1} parent=5 // pred_check_branch
        %109 = sbr.rel (%p106) target = $region24
      $region23: #{tpu_custom_call.1} parent=5 // pred_region
        %s110 = ssub.s32 %s13, 1
        %s111 = sand.u32 %s26, 1
        %s112 = scalar_lea.sflag [#allocation3], %s111
        %s113 = sand.u32 %s26, 1
        %s114 = smul.addr %s113, 16
        %s115 = scalar_lea.vmem [#allocation2], %s114
        // Predicated region
        $region25: #{tpu_custom_call.1} parent=23 // pred_check
          %p116 = pneg %p39
        $region26: #{tpu_custom_call.1} parent=23 // pred_check_branch
          %118 = sbr.rel (%p116) target = $region28
        $region27: #{tpu_custom_call.1} parent=23 // pred_region
          %120 = dma.done %s112, 256
        $region28: #{tpu_custom_call.1} parent=23 // pred_fallthru
          _
        %s121 = sand.u32 %s26, 1
        %s122 = scalar_lea.sflag [#allocation3], %s121
        %s123 = sand.u32 %s26, 1
        %s124 = smul.addr %s123, 16
        %s125 = scalar_lea.vmem [#allocation2], %s124
        %p126 = pneg %p39
        %p127 = pneg %p36
        %p128 = pneg %p65
        %p129 = pneg %p62
        %s130 = sand.u32 %s52, 1
        %s131 = scalar_lea.sflag [#allocation4], %s130
        %s132 = sand.u32 %s52, 1
        %s133 = smul.addr %s132, 16
        %s134 = scalar_lea.vmem [#allocation5], %s133
        %v135 = vld [vmem:[%s115] sm:$0xff]
        %v136 = vld [vmem:[%s115 + $0x8] sm:$0xff]
        %v137 = vmul.f32 %v135, %v135
        %v138 = vmul.f32 %v136, %v136
        %v139 = vadd.f32 %v137, %v138
        %140 = vadd.xlane.f32.xlu0 %v139
        %v141 = vpop.xlane.xlu0 %140
        %v142 = vmax.f32 %v141, 1e-24
        %v143 = vrsqrt.pop %v142
        %v144 = vmul.f32 %v143, %v142
        %v145 = vmul.f32 %v144, %v143
        %v146 = vmul.f32 0.5, %v145
        %v147 = vsub.f32 1.5, %v146
        %v148 = vmul.f32 %v143, %v147
        %vm149 = vweird.f32 %v142
        %vm150 = vweird.f32 %v143
        %vm151 = vmor %vm149, %vm150
        %v152 = vsel %vm151, %v143, %v148
        %v153 = vmul.f32 %v135, %v152
        %v154 = vmul.f32 %v136, %v152
        %155 = vst [vmem:[%s134] sm:$0xff] %v153
        %156 = vst [vmem:[%s134 + $0x8] sm:$0xff] %v154
        %s157 = sand.u32 %s52, 1
        %s158 = scalar_lea.sflag [#allocation4], %s157
        %s159 = sand.u32 %s52, 1
        %s160 = smul.addr %s159, 16
        %s161 = scalar_lea.vmem [#allocation5], %s160
        // Predicated region
        $region29: #{tpu_custom_call.1} parent=23 // pred_check
          %p162 = pneg %p62
        $region30: #{tpu_custom_call.1} parent=23 // pred_check_branch
          %164 = sbr.rel (%p162) target = $region32
        $region31: #{tpu_custom_call.1} parent=23 // pred_region
          %166 = vsyncadd %s158, 0
          %s167 = smul.addr %s18, 2
          %s168 = smul.addr %s167, 8
          %s169 = scalar_lea.hbm %s1, %s168
          %s171 = sshll.u32 %s161, 4
          %s172 = int_to_ptr.vmem [resolvable:$true] %s171
          %s173 = sshll.u32 %s169, 4
          %s174 = int_to_ptr.hbm [resolvable:$true] %s173
          %176 = dma.vmem_to_hbm [thread:$0]  %s172, 256, %s174, %s158
        $region32: #{tpu_custom_call.1} parent=23 // pred_fallthru
          _
      $region24: #{tpu_custom_call.1} parent=5 // pred_fallthru
        _
      %p177 = scmp.le.s32.totalorder 2, %s13
      // Predicated region
      $region33: #{tpu_custom_call.1} parent=5 // pred_check
        %p178 = pneg %p177
      $region34: #{tpu_custom_call.1} parent=5 // pred_check_branch
        %180 = sbr.rel (%p178) target = $region36
      $region35: #{tpu_custom_call.1} parent=5 // pred_region
        %s181 = ssub.s32 %s13, 2
        // Predicated region
        $region37: #{tpu_custom_call.1} parent=35 // pred_check
          %p182 = pneg %p68
        $region38: #{tpu_custom_call.1} parent=35 // pred_check_branch
          %184 = sbr.rel (%p182) target = $region40
        $region39: #{tpu_custom_call.1} parent=35 // pred_region
          %s185 = sand.u32 %s53, 1
          %s186 = scalar_lea.sflag [#allocation4], %s185
          %s187 = sand.u32 %s53, 1
          %s188 = smul.addr %s187, 16
          %s189 = scalar_lea.vmem [#allocation5], %s188
          %191 = dma.done %s186, 256
        $region40: #{tpu_custom_call.1} parent=35 // pred_fallthru
          _
      $region36: #{tpu_custom_call.1} parent=5 // pred_fallthru
        _
    $region6: #{tpu_custom_call.1} parent=1 // loop_footer
      %s17 = sadd.s32 1, %s13
    $region7: #{tpu_custom_call.1} parent=1 // loop_footer_branch
      %12 = sbr.rel target = $region3
    $region8: #{tpu_custom_call.1} parent=1 // loop_exit
      _
    %192 = vsyncpa [#allocation3], 1
    %s193 = scalar_lea.sflag [#allocation3], 1
    %194 = vsyncpa %s193, 1
    %195 = vsyncpa [#allocation4], 1
    %s196 = scalar_lea.sflag [#allocation4], 1
    %197 = vsyncpa %s196, 1

</llo_original>
